<compile_context>
chip_gen: v7x
topology: tpu7x:2x2x1
jax: 0.10.0
libtpu: 0.0.40
codegen_flags: <defaults>
</compile_context>

<pallas_src>
import math
import functools

import jax
import jax.numpy as jnp
from jax.experimental import pallas as pl
from jax.experimental.pallas import tpu as pltpu


# ----------------------------------------------------------------------------
# Tile helper: biggest tile <= target that is a multiple of `align` and evenly
# divides `dim`; the full dim (always a legal block) is the fallback.
# ----------------------------------------------------------------------------
def _pick_tile(dim, target, align):
    if dim <= target:
        return dim
    t = (target // align) * align
    while t >= align:
        if dim % t == 0:
            return t
        t -= align
    return dim


# ----------------------------------------------------------------------------
# Kernel 1: Conv1D == linear layer  y = x @ W + b   (c_attn, c_proj)
# Tiled over (M, N, K); K is the reduction axis with an f32 accumulator.
# ----------------------------------------------------------------------------
def _linear_kernel(x_ref, w_ref, b_ref, o_ref, acc_ref):
    k = pl.program_id(2)

    @pl.when(k == 0)
    def _init():
        acc_ref[...] = jnp.zeros_like(acc_ref)

    acc_ref[...] += jnp.dot(x_ref[...], w_ref[...],
                            preferred_element_type=jnp.float32)

    @pl.when(k == pl.num_programs(2) - 1)
    def _store():
        o_ref[...] = (acc_ref[...] + b_ref[...].astype(jnp.float32)
                      ).astype(o_ref.dtype)


def linear(x2d, w, b, *, tm=256, tn=512, tk=512):
    """x2d: (M, K), w: (K, N), b: (N,) -> (M, N)."""
    M, K = x2d.shape
    N = w.shape[1]
    tm = _pick_tile(M, tm, 8)
    tn = _pick_tile(N, tn, 128)
    tk = _pick_tile(K, tk, 128)
    grid = (M // tm, N // tn, K // tk)
    return pl.pallas_call(
        _linear_kernel,
        out_shape=jax.ShapeDtypeStruct((M, N), x2d.dtype),
        grid=grid,
        in_specs=[
            pl.BlockSpec((tm, tk), lambda i, j, k: (i, k)),
            pl.BlockSpec((tk, tn), lambda i, j, k: (k, j)),
            pl.BlockSpec((1, tn), lambda i, j, k: (0, j)),   # bias follows N tile
        ],
        out_specs=pl.BlockSpec((tm, tn), lambda i, j, k: (i, j)),
        scratch_shapes=[pltpu.VMEM((tm, tn), jnp.float32)],
        compiler_params=pltpu.CompilerParams(
            dimension_semantics=("parallel", "parallel", "arbitrary"),
            vmem_limit_bytes=32 * 1024 * 1024,
        ),
    )(x2d, w, b.reshape(1, N))


# ----------------------------------------------------------------------------
# Kernel 2: flash-style causal attention, all heads per (batch, q-tile).
# q/k/v blocks are (tq|tkv, nx) slabs (heads packed on lanes); the output is a
# lane-dense (tq, nx) slab written directly in (B, T, nx) layout.
# Reproduces GPT-2's  w = w*b - 10000*(1-b)  masking exactly (not -inf).
# ----------------------------------------------------------------------------
def _flash_attn_kernel(q_ref, k_ref, v_ref, o_ref, m_sc, l_sc, acc_sc, *,
                       n_head, scale):
    qi = pl.program_id(1)
    kv = pl.program_id(2)
    last_kv = pl.num_programs(2) - 1

    tq, nx = q_ref.shape
    tkv = k_ref.shape[0]
    d = nx // n_head

    @pl.when(kv == 0)
    def _init():
        m_sc[...] = jnp.full_like(m_sc, -jnp.inf)
        l_sc[...] = jnp.zeros_like(l_sc)
        acc_sc[...] = jnp.zeros_like(acc_sc)

    q_start = qi * tq
    kv_start = kv * tkv

    # Skip KV tiles lying entirely above the causal diagonal (fully masked;
    # their exp(-10000 - m) contribution underflows to exactly 0 in f32).
    @pl.when(kv_start <= q_start + (tq - 1))
    def _compute():
        # Causal mask for this (q-tile, kv-tile); shared by all heads.
        row = q_start + jax.lax.broadcasted_iota(jnp.int32, (tq, tkv), 0)
        col = kv_start + jax.lax.broadcasted_iota(jnp.int32, (tq, tkv), 1)
        causal = col <= row

        for h in range(n_head):                    # static unroll over heads
            hd = pl.ds(h * d, d)
            hh = pl.ds(h, 1)

            q_h = q_ref[:, hd]                     # (tq, d), native dtype to MXU
            if scale:
                q_h = q_h * (1.0 / math.sqrt(d))   # fold scale into q: O(tq*d)
            k_h = k_ref[:, hd]                     # (tkv, d)
            v_h = v_ref[:, hd]                     # (tkv, d)

            # q @ k^T without transposing K anywhere: contract on d.
            s = jax.lax.dot_general(
                q_h, k_h, (((1,), (1,)), ((), ())),
                preferred_element_type=jnp.float32)          # (tq, tkv) f32

            # GPT-2 mask:  w*b - 10000*(1-b)  ==  where(b, w, -1e4)
            s = jnp.where(causal, s, -10000.0)

            m_prev = m_sc[:, hh]                   # (tq, 1)
            l_prev = l_sc[:, hh]
            a_prev = acc_sc[:, hd]                 # (tq, d)

            m_new = jnp.maximum(m_prev, jnp.max(s, axis=-1, keepdims=True))
            alpha = jnp.exp(m_prev - m_new)
            p = jnp.exp(s - m_new)                 # f32 softmax numerator

            m_sc[:, hh] = m_new
            l_sc[:, hh] = alpha * l_prev + jnp.sum(p, axis=-1, keepdims=True)
            acc_sc[:, hd] = alpha * a_prev + jnp.dot(
                p.astype(v_h.dtype), v_h, preferred_element_type=jnp.float32)

    @pl.when(kv == last_kv)
    def _finalize():
        # Normalize per head inside the f32 accumulator, then one dense
        # lane-wide (tq, nx) store of the already-merged-heads output.
        for h in range(n_head):
            hd = pl.ds(h * d, d)
            inv_l = pl.reciprocal(l_sc[:, pl.ds(h, 1)], approx=True)
            acc_sc[:, hd] = acc_sc[:, hd] * inv_l
        o_ref[...] = acc_sc[...].astype(o_ref.dtype)
        # TODO(synk): attn_dropout / resid_dropout omitted (eval mode => identity).


# ----------------------------------------------------------------------------
# Full module forward
# ----------------------------------------------------------------------------
def attention_forward(x, params, n_head, scale=True):
    B, T, nx = x.shape
    D = nx // n_head

    # c_attn projection  -> (B, T, 3*nx)
    qkv = linear(x.reshape(B * T, nx), params["w_attn"], params["b_attn"])
    qkv = qkv.reshape(B, T, 3 * nx)
    q, k, v = jnp.split(qkv, 3, axis=2)            # each (B, T, nx)

    # present = stack(key.transpose(-2,-1), value) -> (2, B, H, T, D)
    kh = k.reshape(B, T, n_head, D).transpose(0, 2, 1, 3)
    vh = v.reshape(B, T, n_head, D).transpose(0, 2, 1, 3)
    present = jnp.stack((kh, vh))

    tq = _pick_tile(T, 128, 8)
    tkv = _pick_tile(T, 128, 8)
    grid = (B, T // tq, T // tkv)

    a = pl.pallas_call(
        functools.partial(_flash_attn_kernel, n_head=n_head, scale=scale),
        out_shape=jax.ShapeDtypeStruct((B, T, nx), x.dtype),
        grid=grid,
        in_specs=[
            pl.BlockSpec((None, tq, nx), lambda b, qi, kv: (b, qi, 0)),
            pl.BlockSpec((None, tkv, nx), lambda b, qi, kv: (b, kv, 0)),
            pl.BlockSpec((None, tkv, nx), lambda b, qi, kv: (b, kv, 0)),
        ],
        out_specs=pl.BlockSpec((None, tq, nx), lambda b, qi, kv: (b, qi, 0)),
        scratch_shapes=[
            pltpu.VMEM((tq, n_head), jnp.float32),   # running row max per head
            pltpu.VMEM((tq, n_head), jnp.float32),   # running denominator
            pltpu.VMEM((tq, nx), jnp.float32),       # running output accumulator
        ],
        compiler_params=pltpu.CompilerParams(
            dimension_semantics=("parallel", "parallel", "arbitrary"),
            vmem_limit_bytes=32 * 1024 * 1024,
        ),
    )(q, k, v)                                      # a is already (B, T, nx)

    # c_proj projection
    out = linear(a.reshape(B * T, nx), params["w_proj"], params["b_proj"])
    return out.reshape(B, T, nx), present


# ----------------------------------------------------------------------------
# Pure-JAX reference (for correctness check)
# ----------------------------------------------------------------------------
def attention_reference(x, params, n_head, scale=True):
    B, T, nx = x.shape
    D = nx // n_head
    qkv = x.reshape(B * T, nx) @ params["w_attn"] + params["b_attn"]
    qkv = qkv.reshape(B, T, 3 * nx)
    q, k, v = jnp.split(qkv, 3, axis=2)
    qh = q.reshape(B, T, n_head, D).transpose(0, 2, 1, 3)
    kh = k.reshape(B, T, n_head, D).transpose(0, 2, 3, 1)
    vh = v.reshape(B, T, n_head, D).transpose(0, 2, 1, 3)
    w = jnp.einsum("bhtd,bhds->bhts", qh, kh)
    if scale:
        w = w / math.sqrt(D)
    b = jnp.tril(jnp.ones((T, T), jnp.float32))[None, None]
    w = w * b - 10000.0 * (1.0 - b)
    w = jax.nn.softmax(w, axis=-1)
    a = jnp.einsum("bhts,bhsd->bhtd", w, vh)
    a = a.transpose(0, 2, 1, 3).reshape(B, T, nx)
    out = a.reshape(B * T, nx) @ params["w_proj"] + params["b_proj"]
    return out.reshape(B, T, nx)


# ----------------------------------------------------------------------------
if __name__ == "__main__":
    B, T, nx, n_head = 2, 8, 32, 4   # n_ctx = T
    key = jax.random.PRNGKey(0)
    k1, k2, k3, k4, k5 = jax.random.split(key, 5)

    # Conv1D(n_state*3, nx): weight (nx, 3*nx), bias (3*nx)
    # Conv1D(n_state,   nx): weight (nx, nx),   bias (nx)
    params = {
        "w_attn": jax.random.normal(k1, (nx, 3 * nx), jnp.float32) * 0.02,
        "b_attn": jax.random.normal(k2, (3 * nx,), jnp.float32) * 0.02,
        "w_proj": jax.random.normal(k3, (nx, nx), jnp.float32) * 0.02,
        "b_proj": jax.random.normal(k4, (nx,), jnp.float32) * 0.02,
    }
    x = jax.random.normal(k5, (B, T, nx), jnp.float32)

    out, present = attention_forward(x, params, n_head, scale=True)
    out = jax.block_until_ready(out)
    present = jax.block_until_ready(present)

    ref = attention_reference(x, params, n_head, scale=True)
    assert out.shape == (B, T, nx)
    assert present.shape == (2, B, n_head, T, nx // n_head)
    assert jnp.allclose(out, ref, atol=1e-4, rtol=1e-4), "mismatch vs reference"

    print("KERNEL_OK")
</pallas_src>

<mosaic_0001>
module attributes {stable_mosaic.version = 11 : i64} {
  func.func @_linear_kernel(%arg0: i32, %arg1: i32, %arg2: i32, %arg3: memref<16x32xf32, #tpu.memory_space<vmem>>, %arg4: memref<32x96xf32, #tpu.memory_space<vmem>>, %arg5: memref<1x96xf32, #tpu.memory_space<vmem>>, %arg6: memref<16x96xf32, #tpu.memory_space<vmem>>, %arg7: memref<16x96xf32, #tpu.memory_space<vmem>>) attributes {dimension_semantics = [#tpu.dimension_semantics<parallel>, #tpu.dimension_semantics<parallel>, #tpu.dimension_semantics<arbitrary>], iteration_bounds = array<i64: 1, 1, 1>, scalar_prefetch = 0 : i64, scratch_operands = 1 : i64, tpu.core_type = #tpu.core_type<tc>, window_params = [{transform_indices = @transform_0, window_bounds = array<i64: 16, 32>}, {transform_indices = @transform_1, window_bounds = array<i64: 32, 96>}, {transform_indices = @transform_2, window_bounds = array<i64: 1, 96>}, {transform_indices = @transform_3, window_bounds = array<i64: 16, 96>}]} {
    %c0_i32 = arith.constant 0 : i32
    %0 = arith.cmpi eq, %arg2, %c0_i32 : i32
    %1 = arith.extui %0 : i1 to i32
    %c0_i32_0 = arith.constant 0 : i32
    %2 = arith.cmpi ne, %1, %c0_i32_0 : i32
    scf.if %2 {
      %cst_10 = arith.constant 0.000000e+00 : f32
      %12 = vector.broadcast %cst_10 : f32 to vector<16x96xf32>
      %c0_11 = arith.constant 0 : index
      %c0_12 = arith.constant 0 : index
      %13 = vector.load %arg7[%c0_11, %c0_12] : memref<16x96xf32, #tpu.memory_space<vmem>>, vector<16x96xf32>
      tpu.vector_store %arg7[%c0_11, %c0_12], %12 {strides = array<i32>} : memref<16x96xf32, #tpu.memory_space<vmem>>, vector<16x96xf32>,
    } else {
    }
    %c0 = arith.constant 0 : index
    %c0_1 = arith.constant 0 : index
    %3 = vector.load %arg7[%c0, %c0_1] : memref<16x96xf32, #tpu.memory_space<vmem>>, vector<16x96xf32>
    %c0_2 = arith.constant 0 : index
    %c0_3 = arith.constant 0 : index
    %4 = vector.load %arg3[%c0_2, %c0_3] : memref<16x32xf32, #tpu.memory_space<vmem>>, vector<16x32xf32>
    %c0_4 = arith.constant 0 : index
    %c0_5 = arith.constant 0 : index
    %5 = vector.load %arg4[%c0_4, %c0_5] : memref<32x96xf32, #tpu.memory_space<vmem>>, vector<32x96xf32>
    %cst = arith.constant dense<0.000000e+00> : vector<16x96xf32>
    %6 = tpu.matmul %4, %5, %cst {dimension_numbers = #tpu.dot_dimension_numbers<[1], [0], [0], [1], [0, 0, 1, 1], [], []>} : vector<16x32xf32>, vector<32x96xf32>, vector<16x96xf32> -> vector<16x96xf32>
    %7 = arith.addf %3, %6 : vector<16x96xf32>
    %c0_6 = arith.constant 0 : index
    %c0_7 = arith.constant 0 : index
    %8 = vector.load %arg7[%c0_6, %c0_7] : memref<16x96xf32, #tpu.memory_space<vmem>>, vector<16x96xf32>
    tpu.vector_store %arg7[%c0_6, %c0_7], %7 {strides = array<i32>} : memref<16x96xf32, #tpu.memory_space<vmem>>, vector<16x96xf32>,
    %c0_i32_8 = arith.constant 0 : i32
    %9 = arith.cmpi eq, %arg2, %c0_i32_8 : i32
    %10 = arith.extui %9 : i1 to i32
    %c0_i32_9 = arith.constant 0 : i32
    %11 = arith.cmpi ne, %10, %c0_i32_9 : i32
    scf.if %11 {
      %c0_10 = arith.constant 0 : index
      %c0_11 = arith.constant 0 : index
      %12 = vector.load %arg7[%c0_10, %c0_11] : memref<16x96xf32, #tpu.memory_space<vmem>>, vector<16x96xf32>
      %c0_12 = arith.constant 0 : index
      %c0_13 = arith.constant 0 : index
      %13 = vector.load %arg5[%c0_12, %c0_13] : memref<1x96xf32, #tpu.memory_space<vmem>>, vector<1x96xf32>
      %14 = vector.broadcast %13 : vector<1x96xf32> to vector<16x96xf32>
      %15 = arith.addf %12, %14 : vector<16x96xf32>
      %c0_14 = arith.constant 0 : index
      %c0_15 = arith.constant 0 : index
      %16 = vector.load %arg6[%c0_14, %c0_15] : memref<16x96xf32, #tpu.memory_space<vmem>>, vector<16x96xf32>
      tpu.vector_store %arg6[%c0_14, %c0_15], %15 {strides = array<i32>} : memref<16x96xf32, #tpu.memory_space<vmem>>, vector<16x96xf32>,
    } else {
    }
    return
  }
  func.func @transform_0(%arg0: i32, %arg1: i32, %arg2: i32) -> (i32, i32) {
    %c0_i32 = arith.constant 0 : i32
    return %arg0, %arg2 : i32, i32
  }
  func.func @transform_1(%arg0: i32, %arg1: i32, %arg2: i32) -> (i32, i32) {
    %c0_i32 = arith.constant 0 : i32
    return %arg2, %arg1 : i32, i32
  }
  func.func @transform_2(%arg0: i32, %arg1: i32, %arg2: i32) -> (i32, i32) {
    %c0_i32 = arith.constant 0 : i32
    %c0_i32_0 = arith.constant 0 : i32
    return %c0_i32, %arg1 : i32, i32
  }
  func.func @transform_3(%arg0: i32, %arg1: i32, %arg2: i32) -> (i32, i32) {
    %c0_i32 = arith.constant 0 : i32
    return %arg0, %arg1 : i32, i32
  }
}

</mosaic_0001>

<llo_original>
// kernel: tpu_custom_call.1
$region0: #{tpu_custom_call.1}
  #allocation0 [shape = 'u32[]', space=smem, size = 0x4, offset = 0x4, fixed_abs, tag = 'smem constant byte address 0x4 - core index']
  #allocation1 [shape = 'u32[144,128]{1,0:T(1,128)}', space=vmem, size = 0x12000, scoped, tag = 'internal scratch']
  #allocation2 [shape = 'f32[16,96]{1,0:T(8,128)}', space=vmem, size = 0x2000, scoped, tag = 'scratch operand']
  %s0 = inlined_call_operand.hbm [shape: f32[16,32], index: 0, kind: input, shape index: {}]
  %s1 = inlined_call_operand.hbm [shape: f32[32,96], index: 1, kind: input, shape index: {}]
  %s2 = inlined_call_operand.vmem [shape: f32[1,96], index: 2, kind: input, shape index: {}]
  %s3 = inlined_call_operand.hbm [shape: f32[16,96], index: 3, kind: output, shape index: {}]
  %s4 = sld [smem:[#allocation0]]
  $region38: #{tpu_custom_call.1} parent=0
    _
  %s6 = ssub.s32 1, %s4
  %s7 = scalar_select 0, %s6, %s4
  $region1: #{tpu_custom_call.1} parent=0
    #allocation3 [shape = 'u8[8192]{0}', space=vmem, size = 0x2000, scoped, tag = 'input window, operand 0, single buffered']
    #allocation4 [shape = 's32[1]{0}', space=sflag, size = 0x4, scoped, tag = 'scoped memory for tpu_custom_call.1']
    #allocation5 [shape = 's32[1]{0}', space=sflag, size = 0x4, scoped, tag = 'scoped memory for tpu_custom_call.1']
    #allocation6 [shape = 'u8[16384]{0}', space=vmem, size = 0x4000, scoped, tag = 'input window, operand 1, single buffered']
    #allocation7 [shape = 's32[1]{0}', space=sflag, size = 0x4, scoped, tag = 'scoped memory for tpu_custom_call.1']
    #allocation8 [shape = 'u8[8192]{0}', space=vmem, size = 0x2000, scoped, tag = 'output window, operand 0, single buffered']
    %8 = vsyncpa [#allocation4], 0
    %9 = vsyncpa [#allocation7], 0
    %10 = vsyncpa [#allocation5], 0
    // Predicated region
    $region2: #{tpu_custom_call.1} parent=1 // pred_check
      _
    $region3: #{tpu_custom_call.1} parent=1 // pred_check_branch
      %12 = sbr.rel (0) target = $region5
    $region4: #{tpu_custom_call.1} parent=1 // pred_region
      %s14 = ssub.s32 256, 256
      %15 = vsyncadd [#allocation4], %s14
      %s16 = sshll.u32 [#allocation3], 4
      %s17 = int_to_ptr.vmem [resolvable:$true] %s16
      %22 = dma.hbm_to_vmem [thread:$0]  %s0, 256, %s17, [#allocation4], 128, 128, 8
    $region5: #{tpu_custom_call.1} parent=1 // pred_fallthru
      _
    // Predicated region
    $region6: #{tpu_custom_call.1} parent=1 // pred_check
      _
    $region7: #{tpu_custom_call.1} parent=1 // pred_check_branch
      %24 = sbr.rel (0) target = $region9
    $region8: #{tpu_custom_call.1} parent=1 // pred_region
      %s26 = ssub.s32 512, 512
      %27 = vsyncadd [#allocation7], %s26
      %s28 = sshll.u32 [#allocation6], 4
      %s29 = int_to_ptr.vmem [resolvable:$true] %s28
      %34 = dma.hbm_to_vmem [thread:$0]  %s1, 512, %s29, [#allocation7], 128, 128, 8
    $region9: #{tpu_custom_call.1} parent=1 // pred_fallthru
      _
    // Predicated region
    $region10: #{tpu_custom_call.1} parent=1 // pred_check
      _
    $region11: #{tpu_custom_call.1} parent=1 // pred_check_branch
      %36 = sbr.rel (0) target = $region13
    $region12: #{tpu_custom_call.1} parent=1 // pred_region
      _
    $region13: #{tpu_custom_call.1} parent=1 // pred_fallthru
      _
    // Predicated region
    $region14: #{tpu_custom_call.1} parent=1 // pred_check
      _
    $region15: #{tpu_custom_call.1} parent=1 // pred_check_branch
      %38 = sbr.rel (0) target = $region17
    $region16: #{tpu_custom_call.1} parent=1 // pred_region
      %39 = dma.done [#allocation4], 256
    $region17: #{tpu_custom_call.1} parent=1 // pred_fallthru
      _
    // Predicated region
    $region18: #{tpu_custom_call.1} parent=1 // pred_check
      _
    $region19: #{tpu_custom_call.1} parent=1 // pred_check_branch
      %41 = sbr.rel (0) target = $region21
    $region20: #{tpu_custom_call.1} parent=1 // pred_region
      %42 = dma.done [#allocation7], 512
    $region21: #{tpu_custom_call.1} parent=1 // pred_fallthru
      _
    %p43 = scmp.eq.s32.totalorder 0, 0
    // Predicated region
    $region22: #{tpu_custom_call.1} parent=1 // pred_check
      %p44 = pneg %p43
    $region23: #{tpu_custom_call.1} parent=1 // pred_check_branch
      %46 = sbr.rel (%p44) target = $region25
    $region24: #{tpu_custom_call.1} parent=1 // pred_region
      %vm47 = vcmask 785408
      %48 = vst.msk [vmem:[#allocation2] sm:$0xff] %vm47, 0.0
      %49 = vst.msk [vmem:[#allocation2 + $0x8] sm:$0xff] %vm47, 0.0
    $region25: #{tpu_custom_call.1} parent=1 // pred_fallthru
      _
    %v50 = vld [vmem:[#allocation2] sm:$0xff]
    %v51 = vld [vmem:[#allocation2 + $0x8] sm:$0xff]
    %v52 = vld [vmem:[#allocation3] sm:$0xff]
    %v53 = vld [vmem:[#allocation3 + $0x8] sm:$0xff]
    %v54 = vld [vmem:[#allocation6] sm:$0xff]
    %v55 = vld [vmem:[#allocation6 + $0x8] sm:$0xff]
    %v56 = vld [vmem:[#allocation6 + $0x10] sm:$0xff]
    %v57 = vld [vmem:[#allocation6 + $0x18] sm:$0xff]
    %vm58 = vcmask 261120
    %v60 = vsel %vm58, %v52, 0
    %v63 = vsel %vm58, %v53, 0
    %65 = vmatprep.subr.mxu0 0.0
    %66 = vmatpush1.msra.mxu0 %v54
    %67 = vmatprep.subr.mxu0 0.0
    %68 = vmatpush1.msra.mxu0 %v55
    %69 = vmatprep.subr.mxu0 0.0
    %70 = vmatpush1.msra.mxu0 %v56
    %71 = vmatprep.subr.mxu0 0.0
    %72 = vmatpush1.msra.mxu0 %v57
    %73 = vmatprep.subr.mxu0 0.0
    %74 = vmatpush1.msra.mxu0 0.0
    %75 = vmatprep.subr.mxu0 0.0
    %76 = vmatpush1.msra.mxu0 0.0
    %77 = vmatprep.subr.mxu0 0.0
    %78 = vmatpush1.msra.mxu0 0.0
    %79 = vmatprep.subr.mxu0 0.0
    %80 = vmatpush1.msra.mxu0 0.0
    %81 = vmatprep.subr.mxu0 0.0
    %82 = vmatpush1.msra.mxu0 0.0
    %83 = vmatprep.subr.mxu0 0.0
    %84 = vmatpush1.msra.mxu0 0.0
    %85 = vmatprep.subr.mxu0 0.0
    %86 = vmatpush1.msra.mxu0 0.0
    %87 = vmatprep.subr.mxu0 0.0
    %88 = vmatpush1.msra.mxu0 0.0
    %89 = vmatprep.subr.mxu0 0.0
    %90 = vmatpush1.msra.mxu0 0.0
    %91 = vmatprep.subr.mxu0 0.0
    %92 = vmatpush1.msra.mxu0 0.0
    %93 = vmatprep.subr.mxu0 0.0
    %94 = vmatpush1.msra.mxu0 0.0
    %95 = vmatprep.subr.mxu0 0.0
    %96 = vmatpush1.msra.mxu0 0.0
    %97 = vmatprep.subr.mxu0 0.0
    %98 = vmatpush1.msra.mxu0 0.0
    %99 = vmatprep.subr.mxu0 0.0
    %100 = vmatpush1.msra.mxu0 0.0
    %101 = vmatprep.subr.mxu0 0.0
    %102 = vmatpush1.msra.mxu0 0.0
    %103 = vmatprep.subr.mxu0 0.0
    %104 = vmatpush1.msra.mxu0 0.0
    %105 = vmatprep.subr.mxu0 0.0
    %106 = vmatpush1.msra.mxu0 0.0
    %107 = vmatprep.subr.mxu0 0.0
    %108 = vmatpush1.msra.mxu0 0.0
    %109 = vmatprep.subr.mxu0 0.0
    %110 = vmatpush1.msra.mxu0 0.0
    %111 = vmatprep.subr.mxu0 0.0
    %112 = vmatpush1.msra.mxu0 0.0
    %113 = vmatprep.subr.mxu0 0.0
    %114 = vmatpush1.msra.mxu0 0.0
    %115 = vmatprep.subr.mxu0 0.0
    %116 = vmatpush1.msra.mxu0 0.0
    %117 = vmatprep.subr.mxu0 0.0
    %118 = vmatpush1.msra.mxu0 0.0
    %119 = vmatprep.subr.mxu0 0.0
    %120 = vmatpush1.msra.mxu0 0.0
    %121 = vmatprep.subr.mxu0 0.0
    %122 = vmatpush1.msra.mxu0 0.0
    %123 = vmatprep.subr.mxu0 0.0
    %124 = vmatpush1.msra.mxu0 0.0
    %125 = vmatprep.subr.mxu0 0.0
    %126 = vmatpush1.msra.mxu0 0.0
    %127 = vmatprep.subr.mxu0 0.0
    %128 = vmatpush1.msra.mxu0 0.0
    %129 = vmatprep.mubr.f32.mxu0 0.0
    %130 = vmatmul.mubr.f32.gmra.mrb[0].mxu0 %v60
    %v131 = vpop.f32.mrb[0].mxu0
    %v132 = vadd.f32 0.0, %v131
    %v133 = vpop.f32.mrb[0].mxu0
    %134 = vmatprep.mubr.f32.mxu0 0.0
    %135 = vmatmul.mubr.f32.gmra.mrb[0].mxu0 %v63
    %v136 = vpop.f32.mrb[0].mxu0
    %v137 = vadd.f32 0.0, %v136
    %v138 = vpop.f32.mrb[0].mxu0
    %139 = vdwg.mxu0
    %v140 = vadd.f32 %v50, %v132
    %v141 = vadd.f32 %v51, %v137
    %vm142 = vcmask 785408
    %143 = vst.msk [vmem:[#allocation2] sm:$0xff] %vm142, %v140
    %144 = vst.msk [vmem:[#allocation2 + $0x8] sm:$0xff] %vm142, %v141
    // Predicated region
    $region26: #{tpu_custom_call.1} parent=1 // pred_check
      %p145 = pneg %p43
    $region27: #{tpu_custom_call.1} parent=1 // pred_check_branch
      %147 = sbr.rel (%p145) target = $region29
    $region28: #{tpu_custom_call.1} parent=1 // pred_region
      %v148 = vld [vmem:[#allocation2] sm:$0xff]
      %v149 = vld [vmem:[#allocation2 + $0x8] sm:$0xff]
      %v150 = vld [vmem:[%s2] sm:$0x1]
      %v152 = vlaneseq
      %v153 = vshrl.u32 %v152, 7
      %v154 = vsub.s32 0, %v153
      %v155 = vrot.slane %v150, %v154
      %v157 = vadd.f32 %v148, %v155
      %v158 = vadd.f32 %v149, %v155
      %159 = vst.msk [vmem:[#allocation8] sm:$0xff] %vm142, %v157
      %160 = vst.msk [vmem:[#allocation8 + $0x8] sm:$0xff] %vm142, %v158
    $region29: #{tpu_custom_call.1} parent=1 // pred_fallthru
      _
    // Predicated region
    $region30: #{tpu_custom_call.1} parent=1 // pred_check
      _
    $region31: #{tpu_custom_call.1} parent=1 // pred_check_branch
      %162 = sbr.rel (0) target = $region33
    $region32: #{tpu_custom_call.1} parent=1 // pred_region
      %s164 = ssub.s32 256, 256
      %165 = vsyncadd [#allocation5], %s164
      %s166 = sshll.u32 [#allocation8], 4
      %s167 = int_to_ptr.vmem [resolvable:$true] %s166
      %172 = dma.vmem_to_hbm [thread:$0]  %s167, 256, %s3, [#allocation5], 128, 128, 8
    $region33: #{tpu_custom_call.1} parent=1 // pred_fallthru
      _
    // Predicated region
    $region34: #{tpu_custom_call.1} parent=1 // pred_check
      _
    $region35: #{tpu_custom_call.1} parent=1 // pred_check_branch
      %174 = sbr.rel (0) target = $region37
    $region36: #{tpu_custom_call.1} parent=1 // pred_region
      %175 = dma.done [#allocation5], 256
    $region37: #{tpu_custom_call.1} parent=1 // pred_fallthru
      _
    %176 = vsyncpa [#allocation4], 1
    %177 = vsyncpa [#allocation7], 1
    %178 = vsyncpa [#allocation5], 1

</llo_original>
